<compile_context>
chip_gen: v7x
topology: tpu7x:2x2x1
jax: 0.10.0
libtpu: 0.0.40
codegen_flags: <defaults>
</compile_context>

<pallas_src>
import jax
import jax.numpy as jnp
from jax import lax
from jax.experimental import pallas as pl
from jax.experimental.pallas import tpu as pltpu

# ----------------------------------------------------------------------------
# Config (mirrors the PyTorch module's config dict)
# ----------------------------------------------------------------------------
CONFIG = {
    "fine_concat_coarse_feat": True,
    "fine_window_size": 5,             # W
    "coarse": {"d_model": 32},         # d_model_c
    "fine": {"d_model": 16},           # d_model_f
}

M_TILE_MAX = 1024        # rows of matches per grid step (bf16: ~7 MB double-buffered)
MEGACORE_SPLIT_MIN = 512  # force >=2 grid blocks above this many matches (v7x: 2 TCs)


def _round_up(x, m):
    return ((x + m - 1) // m) * m


def _cdiv(a, b):
    return -(-a // b)


# ----------------------------------------------------------------------------
# Pallas kernel: ONE fused matmul per image per tile.
#   x*_ref : [m_tile, WW*Cf + Cc]  bf16   (window lanes ++ coarse lanes)
#   w_ref  : [WW*Cf + Cc, WW*Cf]   bf16   folded weight (block-diag fine ++ tiled coarse)
#   b_ref  : [1, WW*Cf]            f32    folded bias (down_b@merge_w_c + merge_b, tiled)
#   out*   : [m_tile, WW*Cf]       bf16
# ----------------------------------------------------------------------------
def fine_merge_kernel(x0_ref, x1_ref, w_ref, b_ref, out0_ref, out1_ref):
    w = w_ref[...]
    b = b_ref[...]
    out0_ref[...] = (
        jnp.dot(x0_ref[...], w, preferred_element_type=jnp.float32,
                precision=lax.Precision.DEFAULT) + b
    ).astype(out0_ref.dtype)
    out1_ref[...] = (
        jnp.dot(x1_ref[...], w, preferred_element_type=jnp.float32,
                precision=lax.Precision.DEFAULT) + b
    ).astype(out1_ref.dtype)


def pallas_fine_merge_pair(x0, x1, w_big, b_tiled, m_tile):
    """x*: [Mp, K] bf16 combined slabs; returns two [Mp, F] bf16 merged features."""
    Mp, K = x0.shape
    F = w_big.shape[1]
    row_in = pl.BlockSpec((m_tile, K), lambda i: (i, 0))
    row_out = pl.BlockSpec((m_tile, F), lambda i: (i, 0))

    return pl.pallas_call(
        fine_merge_kernel,
        out_shape=(jax.ShapeDtypeStruct((Mp, F), x0.dtype),
                   jax.ShapeDtypeStruct((Mp, F), x1.dtype)),
        grid_spec=pltpu.PrefetchScalarGridSpec(
            num_scalar_prefetch=0,
            grid=(Mp // m_tile,),
            in_specs=[
                row_in,                                    # slab image 0
                row_in,                                    # slab image 1
                pl.BlockSpec((K, F), lambda i: (0, 0)),    # folded weight (resident)
                pl.BlockSpec((1, F), lambda i: (0, 0)),    # folded bias  (resident)
            ],
            out_specs=(row_out, row_out),
        ),
        compiler_params=pltpu.CompilerParams(
            dimension_semantics=("parallel",)),
    )(x0, x1, w_big, b_tiled)


# ----------------------------------------------------------------------------
# JAX glue: F.unfold(kernel=(W,W), stride, padding=W//2) window gather at the
# selected coarse positions, flattened ww-major to [n, W*W*C].  Border handling
# is clamp + zero-mask (no padded copy of the full feature map).
# TODO(synk): fuse this data-dependent gather into the kernel via
# PrefetchScalarGridSpec(num_scalar_prefetch=3) + batched pltpu.make_async_copy
# into double-buffered VMEM so the [Mp, 432] slabs never hit HBM.
# ----------------------------------------------------------------------------
def gather_windows_flat(feat_nhwc, b_ids, idx, W_c, W, stride):
    n = b_ids.shape[0]
    H_f, W_f, C = feat_nhwc.shape[1], feat_nhwc.shape[2], feat_nhwc.shape[3]
    half = W // 2
    hc = idx // W_c
    wc = idx % W_c
    kk = jnp.arange(W)
    rows = hc[:, None] * stride + kk[None, :] - half      # [n, W]
    cols = wc[:, None] * stride + kk[None, :] - half      # [n, W]
    valid = ((rows >= 0) & (rows < H_f))[:, :, None] & \
            ((cols >= 0) & (cols < W_f))[:, None, :]      # [n, W, W]
    rcl = jnp.clip(rows, 0, H_f - 1)
    ccl = jnp.clip(cols, 0, W_f - 1)
    win = feat_nhwc[b_ids[:, None, None], rcl[:, :, None], ccl[:, None, :], :]  # [n,W,W,C]
    win = win * valid[..., None].astype(win.dtype)
    # flat index = (kh*W + kw)*C + c  ==  ww*C + c   (unfold's ww-major ordering)
    return win.reshape(n, W * W * C)


# ----------------------------------------------------------------------------
# Module port
# ----------------------------------------------------------------------------
class FinePreprocessPallas:
    def __init__(self, config, key, compute_dtype=jnp.bfloat16):
        self.cat_c_feat = config["fine_concat_coarse_feat"]
        self.W = config["fine_window_size"]
        d_c = config["coarse"]["d_model"]
        d_f = config["fine"]["d_model"]
        self.d_model_f = d_f
        self.compute_dtype = compute_dtype
        WW = self.W * self.W

        k1, k2, k3, k4 = jax.random.split(key, 4)
        # kaiming_normal_(mode='fan_out', nonlinearity='relu'): std = sqrt(2/out_feat)
        # Weights stored as [in, out] (transpose of torch's [out, in]); kept in f32.
        self.down_w = jax.random.normal(k1, (d_c, d_f), jnp.float32) * jnp.sqrt(2.0 / d_f)
        self.down_b = jax.random.normal(k2, (1, d_f), jnp.float32) * 0.01
        merge_w = jax.random.normal(k3, (2 * d_f, d_f), jnp.float32) * jnp.sqrt(2.0 / d_f)
        self.merge_w_f = merge_w[:d_f]     # multiplies the fine window features
        self.merge_w_c = merge_w[d_f:]     # multiplies the down-projected coarse feat
        self.merge_b = jax.random.normal(k4, (1, d_f), jnp.float32) * 0.01

        if self.cat_c_feat:
            # Fold down_proj + merge_feat into ONE weight in the flattened layout:
            #   out[m, ww*Cf + j] = sum_i win[m, ww*Cf + i] * merge_w_f[i, j]
            #                     + sum_c fc[m, c] * (down_w @ merge_w_c)[c, j]
            #                     + (down_b @ merge_w_c + merge_b)[j]
            eye_ww = jnp.eye(WW, dtype=jnp.float32)
            w_fine_bd = jnp.kron(eye_ww, self.merge_w_f)                  # [WW*Cf, WW*Cf]
            w_coarse = jnp.tile(self.down_w @ self.merge_w_c, (1, WW))    # [Cc,    WW*Cf]
            self.w_big = jnp.concatenate([w_fine_bd, w_coarse],
                                         axis=0).astype(compute_dtype)    # [WW*Cf+Cc, WW*Cf]
            self.b_tiled = jnp.tile(self.down_b @ self.merge_w_c + self.merge_b,
                                    (1, WW)).astype(jnp.float32)           # [1, WW*Cf]

    def __call__(self, feat_f0, feat_f1, feat_c0, feat_c1, data):
        W = self.W
        H_f, _ = data["hw0_f"]
        H_c, W_c = data["hw0_c"]
        stride = H_f // H_c
        data["W"] = W   # intentional side effect, mirrors the PyTorch module's data.update
        b_ids, i_ids, j_ids = data["b_ids"], data["i_ids"], data["j_ids"]

        n = b_ids.shape[0]
        if n == 0:
            empty = jnp.zeros((0, W * W, self.d_model_f), self.compute_dtype)
            return empty, empty

        # TODO(synk): produce the fine feature maps channel-last upstream so this
        # full-map NCHW->NHWC transpose disappears (it is the only remaining
        # full-feature-map copy; the border pad was already removed via clamp+mask).
        f0 = jnp.transpose(feat_f0, (0, 2, 3, 1))
        f1 = jnp.transpose(feat_f1, (0, 2, 3, 1))

        if not self.cat_c_feat:
            win0 = gather_windows_flat(f0, b_ids, i_ids, W_c, W, stride)
            win1 = gather_windows_flat(f1, b_ids, j_ids, W_c, W, stride)
            return (win0.reshape(n, W * W, self.d_model_f),
                    win1.reshape(n, W * W, self.d_model_f))

        # Tail-balanced tile sizing; keep >=2 grid blocks when there is enough work
        # so the "parallel" axis can shard across v7x's two TensorCores.
        nb = max(1, _cdiv(n, M_TILE_MAX))
        if nb == 1 and n >= MEGACORE_SPLIT_MIN:
            nb = 2
        m_tile = _round_up(_cdiv(n, nb), 16)   # bf16 sublane-pack aligned
        Mp = m_tile * nb

        # Pad the tiny index vectors (NOT the big slabs) so the gathered slabs are
        # born at padded size; index 0 is always valid, padded rows are sliced off.
        padn = Mp - n
        b_p = jnp.pad(b_ids, (0, padn))
        i_p = jnp.pad(i_ids, (0, padn))
        j_p = jnp.pad(j_ids, (0, padn))

        dt = self.compute_dtype
        x0 = jnp.concatenate(
            [gather_windows_flat(f0, b_p, i_p, W_c, W, stride),
             feat_c0[b_p, i_p]], axis=-1).astype(dt)        # [Mp, WW*Cf + Cc]
        x1 = jnp.concatenate(
            [gather_windows_flat(f1, b_p, j_p, W_c, W, stride),
             feat_c1[b_p, j_p]], axis=-1).astype(dt)        # [Mp, WW*Cf + Cc]

        out0, out1 = pallas_fine_merge_pair(x0, x1, self.w_big, self.b_tiled, m_tile)
        return (out0[:n].reshape(n, W * W, self.d_model_f),
                out1[:n].reshape(n, W * W, self.d_model_f))


# ----------------------------------------------------------------------------
# Pure-JAX references
# ----------------------------------------------------------------------------
def reference_merge_f32(win_flat, fc, model, n, W, d_f):
    """Exact PyTorch semantics in f32 with the ORIGINAL (un-folded) weights."""
    win = win_flat.reshape(n, W * W, d_f)
    c_down = fc @ model.down_w + model.down_b
    cat = jnp.concatenate([win, jnp.broadcast_to(c_down[:, None, :], win.shape)], -1)
    merge_w = jnp.concatenate([model.merge_w_f, model.merge_w_c], axis=0)
    return cat @ merge_w + model.merge_b


def reference_folded_bf16(win_flat, fc, model, n, W, d_f):
    """Same folded bf16 weights / bf16 inputs, f32 accumulation (tight plumbing check)."""
    x = jnp.concatenate([win_flat, fc], -1).astype(jnp.bfloat16).astype(jnp.float32)
    y = x @ model.w_big.astype(jnp.float32) + model.b_tiled
    return y.reshape(n, W * W, d_f)


if __name__ == "__main__":
    key = jax.random.PRNGKey(0)
    k_model, k0, k1, k2, k3, kb, ki, kj = jax.random.split(key, 8)

    N = 2
    H_f = W_f = 16
    H_c = W_c = 8
    d_model_c = CONFIG["coarse"]["d_model"]   # 32
    d_model_f = CONFIG["fine"]["d_model"]     # 16
    Wwin = CONFIG["fine_window_size"]         # 5
    n_match = 37                              # unaligned, exercises tail padding

    feat_f0 = jax.random.normal(k0, (N, d_model_f, H_f, W_f), jnp.float32)  # NCHW
    feat_f1 = jax.random.normal(k1, (N, d_model_f, H_f, W_f), jnp.float32)  # NCHW
    feat_c0 = jax.random.normal(k2, (N, H_c * W_c, d_model_c), jnp.float32)
    feat_c1 = jax.random.normal(k3, (N, H_c * W_c, d_model_c), jnp.float32)

    data = {
        "hw0_f": (H_f, W_f),
        "hw0_c": (H_c, W_c),
        "b_ids": jax.random.randint(kb, (n_match,), 0, N),
        "i_ids": jax.random.randint(ki, (n_match,), 0, H_c * W_c),
        "j_ids": jax.random.randint(kj, (n_match,), 0, H_c * W_c),
    }

    model = FinePreprocessPallas(CONFIG, k_model)
    out0, out1 = model(feat_f0, feat_f1, feat_c0, feat_c1, data)
    out0 = jax.block_until_ready(out0)
    out1 = jax.block_until_ready(out1)

    assert out0.shape == (n_match, Wwin * Wwin, d_model_f)
    assert out1.shape == (n_match, Wwin * Wwin, d_model_f)

    # Build the same gathered features for the references.
    stride = H_f // H_c
    f0 = jnp.transpose(feat_f0, (0, 2, 3, 1))
    f1 = jnp.transpose(feat_f1, (0, 2, 3, 1))
    w0 = gather_windows_flat(f0, data["b_ids"], data["i_ids"], W_c, Wwin, stride)
    w1 = gather_windows_flat(f1, data["b_ids"], data["j_ids"], W_c, Wwin, stride)
    fc0 = feat_c0[data["b_ids"], data["i_ids"]]
    fc1 = feat_c1[data["b_ids"], data["j_ids"]]

    o0 = out0.astype(jnp.float32)
    o1 = out1.astype(jnp.float32)

    # (a) tight check of the Pallas plumbing (same bf16 quantization, f32 accumulation)
    ref0_q = reference_folded_bf16(w0, fc0, model, n_match, Wwin, d_model_f)
    ref1_q = reference_folded_bf16(w1, fc1, model, n_match, Wwin, d_model_f)
    assert jnp.allclose(o0, ref0_q, atol=2e-2, rtol=2e-2)
    assert jnp.allclose(o1, ref1_q, atol=2e-2, rtol=2e-2)

    # (b) loose check against exact f32 PyTorch semantics (un-folded weights);
    #     slack covers the bf16 I/O quantization of the fast path.
    ref0_f = reference_merge_f32(w0, fc0, model, n_match, Wwin, d_model_f)
    ref1_f = reference_merge_f32(w1, fc1, model, n_match, Wwin, d_model_f)
    assert jnp.allclose(o0, ref0_f, atol=2.5e-1, rtol=5e-2)
    assert jnp.allclose(o1, ref1_f, atol=2.5e-1, rtol=5e-2)

    print("KERNEL_OK")
</pallas_src>

<mosaic_0001>
module attributes {stable_mosaic.version = 11 : i64} {
  func.func @fine_merge_kernel(%arg0: i32, %arg1: memref<48x432xbf16, #tpu.memory_space<vmem>>, %arg2: memref<48x432xbf16, #tpu.memory_space<vmem>>, %arg3: memref<432x400xbf16, #tpu.memory_space<vmem>>, %arg4: memref<1x400xf32, #tpu.memory_space<vmem>>, %arg5: memref<48x400xbf16, #tpu.memory_space<vmem>>, %arg6: memref<48x400xbf16, #tpu.memory_space<vmem>>) attributes {dimension_semantics = [#tpu.dimension_semantics<parallel>], iteration_bounds = array<i64: 1>, scalar_prefetch = 0 : i64, scratch_operands = 0 : i64, tpu.core_type = #tpu.core_type<tc>, window_params = [{transform_indices = @transform_0, window_bounds = array<i64: 48, 432>}, {transform_indices = @transform_1, window_bounds = array<i64: 48, 432>}, {pipeline_mode = #tpu.pipeline_mode<synchronous>, transform_indices = @transform_2, window_bounds = array<i64: 432, 400>}, {pipeline_mode = #tpu.pipeline_mode<synchronous>, transform_indices = @transform_3, window_bounds = array<i64: 1, 400>}, {transform_indices = @transform_4, window_bounds = array<i64: 48, 400>}, {transform_indices = @transform_5, window_bounds = array<i64: 48, 400>}]} {
    %c0 = arith.constant 0 : index
    %c0_0 = arith.constant 0 : index
    %0 = vector.load %arg3[%c0, %c0_0] : memref<432x400xbf16, #tpu.memory_space<vmem>>, vector<432x400xbf16>
    %c0_1 = arith.constant 0 : index
    %c0_2 = arith.constant 0 : index
    %1 = vector.load %arg4[%c0_1, %c0_2] : memref<1x400xf32, #tpu.memory_space<vmem>>, vector<1x400xf32>
    %c0_3 = arith.constant 0 : index
    %c0_4 = arith.constant 0 : index
    %2 = vector.load %arg1[%c0_3, %c0_4] : memref<48x432xbf16, #tpu.memory_space<vmem>>, vector<48x432xbf16>
    %cst = arith.constant dense<0.000000e+00> : vector<48x400xf32>
    %3 = tpu.matmul %2, %0, %cst {dimension_numbers = #tpu.dot_dimension_numbers<[1], [0], [0], [1], [0, 0, 1, 1], [], []>} : vector<48x432xbf16>, vector<432x400xbf16>, vector<48x400xf32> -> vector<48x400xf32>
    %4 = vector.broadcast %1 : vector<1x400xf32> to vector<48x400xf32>
    %5 = arith.addf %3, %4 : vector<48x400xf32>
    %6 = arith.truncf %5 : vector<48x400xf32> to vector<48x400xbf16>
    %c0_5 = arith.constant 0 : index
    %c0_6 = arith.constant 0 : index
    %7 = vector.load %arg5[%c0_5, %c0_6] : memref<48x400xbf16, #tpu.memory_space<vmem>>, vector<48x400xbf16>
    tpu.vector_store %arg5[%c0_5, %c0_6], %6 {strides = array<i32>} : memref<48x400xbf16, #tpu.memory_space<vmem>>, vector<48x400xbf16>,
    %c0_7 = arith.constant 0 : index
    %c0_8 = arith.constant 0 : index
    %8 = vector.load %arg2[%c0_7, %c0_8] : memref<48x432xbf16, #tpu.memory_space<vmem>>, vector<48x432xbf16>
    %cst_9 = arith.constant dense<0.000000e+00> : vector<48x400xf32>
    %9 = tpu.matmul %8, %0, %cst_9 {dimension_numbers = #tpu.dot_dimension_numbers<[1], [0], [0], [1], [0, 0, 1, 1], [], []>} : vector<48x432xbf16>, vector<432x400xbf16>, vector<48x400xf32> -> vector<48x400xf32>
    %10 = vector.broadcast %1 : vector<1x400xf32> to vector<48x400xf32>
    %11 = arith.addf %9, %10 : vector<48x400xf32>
    %12 = arith.truncf %11 : vector<48x400xf32> to vector<48x400xbf16>
    %c0_10 = arith.constant 0 : index
    %c0_11 = arith.constant 0 : index
    %13 = vector.load %arg6[%c0_10, %c0_11] : memref<48x400xbf16, #tpu.memory_space<vmem>>, vector<48x400xbf16>
    tpu.vector_store %arg6[%c0_10, %c0_11], %12 {strides = array<i32>} : memref<48x400xbf16, #tpu.memory_space<vmem>>, vector<48x400xbf16>,
    return
  }
  func.func @transform_0(%arg0: i32) -> (i32, i32) {
    %c0_i32 = arith.constant 0 : i32
    %c0_i32_0 = arith.constant 0 : i32
    return %arg0, %c0_i32 : i32, i32
  }
  func.func @transform_1(%arg0: i32) -> (i32, i32) {
    %c0_i32 = arith.constant 0 : i32
    %c0_i32_0 = arith.constant 0 : i32
    return %arg0, %c0_i32 : i32, i32
  }
  func.func @transform_2(%arg0: i32) -> (i32, i32) {
    %c0_i32 = arith.constant 0 : i32
    %c0_i32_0 = arith.constant 0 : i32
    %c0_i32_1 = arith.constant 0 : i32
    return %c0_i32, %c0_i32_0 : i32, i32
  }
  func.func @transform_3(%arg0: i32) -> (i32, i32) {
    %c0_i32 = arith.constant 0 : i32
    %c0_i32_0 = arith.constant 0 : i32
    %c0_i32_1 = arith.constant 0 : i32
    return %c0_i32, %c0_i32_0 : i32, i32
  }
  func.func @transform_4(%arg0: i32) -> (i32, i32) {
    %c0_i32 = arith.constant 0 : i32
    %c0_i32_0 = arith.constant 0 : i32
    return %arg0, %c0_i32 : i32, i32
  }
  func.func @transform_5(%arg0: i32) -> (i32, i32) {
    %c0_i32 = arith.constant 0 : i32
    %c0_i32_0 = arith.constant 0 : i32
    return %arg0, %c0_i32 : i32, i32
  }
}

</mosaic_0001>

<llo_original>
// kernel: tpu_custom_call.1
$region0: #{tpu_custom_call.1}
  #allocation0 [shape = 'u32[]', space=smem, size = 0x4, offset = 0x4, fixed_abs, tag = 'smem constant byte address 0x4 - core index']
  #allocation1 [shape = 'u32[144,128]{1,0:T(1,128)}', space=vmem, size = 0x12000, scoped, tag = 'internal scratch']
  %s0 = inlined_call_operand.vmem [shape: bf16[48,432], index: 0, kind: input, shape index: {}]
  %s1 = inlined_call_operand.vmem [shape: bf16[48,432], index: 1, kind: input, shape index: {}]
  %s2 = inlined_call_operand.vmem [shape: bf16[432,400], index: 2, kind: input, shape index: {}]
  %s3 = inlined_call_operand.vmem [shape: f32[1,400], index: 3, kind: input, shape index: {}]
  %s4 = inlined_call_operand.hbm [shape: bf16[48,400], index: 4, kind: output, shape index: {0}]
  %s5 = inlined_call_operand.hbm [shape: bf16[48,400], index: 5, kind: output, shape index: {1}]
  %6 = xla_tuple %s4, %s5
  %s7 = sld [smem:[#allocation0]]
  $region34: #{tpu_custom_call.1} parent=0
    _
  %s9 = ssub.s32 1, %s7
  %s10 = scalar_select 0, %s9, %s7
  $region1: #{tpu_custom_call.1} parent=0
    #allocation2 [shape = 'u8[49152]{0}', space=vmem, size = 0xc000, scoped, tag = 'output window, operand 0, single buffered']
    #allocation3 [shape = 's32[1]{0}', space=sflag, size = 0x4, scoped, tag = 'scoped memory for tpu_custom_call.1']
    #allocation4 [shape = 'u8[49152]{0}', space=vmem, size = 0xc000, scoped, tag = 'output window, operand 1, single buffered']
    #allocation5 [shape = 's32[1]{0}', space=sflag, size = 0x4, scoped, tag = 'scoped memory for tpu_custom_call.1']
    %11 = vsyncpa [#allocation3], 0
    %12 = vsyncpa [#allocation5], 0
    // Predicated region
    $region2: #{tpu_custom_call.1} parent=1 // pred_check
      _
    $region3: #{tpu_custom_call.1} parent=1 // pred_check_branch
      %14 = sbr.rel (0) target = $region5
    $region4: #{tpu_custom_call.1} parent=1 // pred_region
      _
    $region5: #{tpu_custom_call.1} parent=1 // pred_fallthru
      _
    // Predicated region
    $region6: #{tpu_custom_call.1} parent=1 // pred_check
      _
    $region7: #{tpu_custom_call.1} parent=1 // pred_check_branch
      %16 = sbr.rel (0) target = $region9
    $region8: #{tpu_custom_call.1} parent=1 // pred_region
      _
    $region9: #{tpu_custom_call.1} parent=1 // pred_fallthru
      _
    // Predicated region
    $region10: #{tpu_custom_call.1} parent=1 // pred_check
      _
    $region11: #{tpu_custom_call.1} parent=1 // pred_check_branch
      %18 = sbr.rel (0) target = $region13
    $region12: #{tpu_custom_call.1} parent=1 // pred_region
      _
    $region13: #{tpu_custom_call.1} parent=1 // pred_fallthru
      _
    // Predicated region
    $region14: #{tpu_custom_call.1} parent=1 // pred_check
      _
    $region15: #{tpu_custom_call.1} parent=1 // pred_check_branch
      %20 = sbr.rel (0) target = $region17
    $region16: #{tpu_custom_call.1} parent=1 // pred_region
      _
    $region17: #{tpu_custom_call.1} parent=1 // pred_fallthru
      _
    %v22 = vld [vmem:[%s2] sm:$0xff]
    %v23 = vld [vmem:[%s2 + $0x8] sm:$0xff]
    %v24 = vld [vmem:[%s2 + $0x10] sm:$0xff]
    %v25 = vld [vmem:[%s2 + $0x18] sm:$0xff]
    %v26 = vld [vmem:[%s2 + $0x20] sm:$0xff]
    %v27 = vld [vmem:[%s2 + $0x28] sm:$0xff]
    %v28 = vld [vmem:[%s2 + $0x30] sm:$0xff]
    %v29 = vld [vmem:[%s2 + $0x38] sm:$0xff]
    %v30 = vld [vmem:[%s2 + $0x40] sm:$0xff]
    %v31 = vld [vmem:[%s2 + $0x48] sm:$0xff]
    %v32 = vld [vmem:[%s2 + $0x50] sm:$0xff]
    %v33 = vld [vmem:[%s2 + $0x58] sm:$0xff]
    %v34 = vld [vmem:[%s2 + $0x60] sm:$0xff]
    %v35 = vld [vmem:[%s2 + $0x68] sm:$0xff]
    %v36 = vld [vmem:[%s2 + $0x70] sm:$0xff]
    %v37 = vld [vmem:[%s2 + $0x78] sm:$0xff]
    %v38 = vld [vmem:[%s2 + $0x80] sm:$0xff]
    %v39 = vld [vmem:[%s2 + $0x88] sm:$0xff]
    %v40 = vld [vmem:[%s2 + $0x90] sm:$0xff]
    %v41 = vld [vmem:[%s2 + $0x98] sm:$0xff]
    %v42 = vld [vmem:[%s2 + $0xa0] sm:$0xff]
    %v43 = vld [vmem:[%s2 + $0xa8] sm:$0xff]
    %v44 = vld [vmem:[%s2 + $0xb0] sm:$0xff]
    %v45 = vld [vmem:[%s2 + $0xb8] sm:$0xff]
    %v46 = vld [vmem:[%s2 + $0xc0] sm:$0xff]
    %v47 = vld [vmem:[%s2 + $0xc8] sm:$0xff]
    %v48 = vld [vmem:[%s2 + $0xd0] sm:$0xff]
    %v49 = vld [vmem:[%s2 + $0xd8] sm:$0xff]
    %v50 = vld [vmem:[%s2 + $0xe0] sm:$0xff]
    %v51 = vld [vmem:[%s2 + $0xe8] sm:$0xff]
    %v52 = vld [vmem:[%s2 + $0xf0] sm:$0xff]
    %v53 = vld [vmem:[%s2 + $0xf8] sm:$0xff]
    %v54 = vld [vmem:[%s2 + $0x100] sm:$0xff]
    %v55 = vld [vmem:[%s2 + $0x108] sm:$0xff]
    %v56 = vld [vmem:[%s2 + $0x110] sm:$0xff]
    %v57 = vld [vmem:[%s2 + $0x118] sm:$0xff]
    %v58 = vld [vmem:[%s2 + $0x120] sm:$0xff]
    %v59 = vld [vmem:[%s2 + $0x128] sm:$0xff]
    %v60 = vld [vmem:[%s2 + $0x130] sm:$0xff]
    %v61 = vld [vmem:[%s2 + $0x138] sm:$0xff]
    %v62 = vld [vmem:[%s2 + $0x140] sm:$0xff]
    %v63 = vld [vmem:[%s2 + $0x148] sm:$0xff]
    %v64 = vld [vmem:[%s2 + $0x150] sm:$0xff]
    %v65 = vld [vmem:[%s2 + $0x158] sm:$0xff]
    %v66 = vld [vmem:[%s2 + $0x160] sm:$0xff]
    %v67 = vld [vmem:[%s2 + $0x168] sm:$0xff]
    %v68 = vld [vmem:[%s2 + $0x170] sm:$0xff]
    %v69 = vld [vmem:[%s2 + $0x178] sm:$0xff]
    %v70 = vld [vmem:[%s2 + $0x180] sm:$0xff]
    %v71 = vld [vmem:[%s2 + $0x188] sm:$0xff]
    %v72 = vld [vmem:[%s2 + $0x190] sm:$0xff]
    %v73 = vld [vmem:[%s2 + $0x198] sm:$0xff]
    %v74 = vld [vmem:[%s2 + $0x1a0] sm:$0xff]
    %v75 = vld [vmem:[%s2 + $0x1a8] sm:$0xff]
    %v76 = vld [vmem:[%s2 + $0x1b0] sm:$0xff]
    %v77 = vld [vmem:[%s2 + $0x1b8] sm:$0xff]
    %v78 = vld [vmem:[%s2 + $0x1c0] sm:$0xff]
    %v79 = vld [vmem:[%s2 + $0x1c8] sm:$0xff]
    %v80 = vld [vmem:[%s2 + $0x1d0] sm:$0xff]
    %v81 = vld [vmem:[%s2 + $0x1d8] sm:$0xff]
    %v82 = vld [vmem:[%s2 + $0x1e0] sm:$0xff]
    %v83 = vld [vmem:[%s2 + $0x1e8] sm:$0xff]
    %v84 = vld [vmem:[%s2 + $0x1f0] sm:$0xff]
    %v85 = vld [vmem:[%s2 + $0x1f8] sm:$0xff]
    %v86 = vld [vmem:[%s2 + $0x200] sm:$0xff]
    %v87 = vld [vmem:[%s2 + $0x208] sm:$0xff]
    %v88 = vld [vmem:[%s2 + $0x210] sm:$0xff]
    %v89 = vld [vmem:[%s2 + $0x218] sm:$0xff]
    %v90 = vld [vmem:[%s2 + $0x220] sm:$0xff]
    %v91 = vld [vmem:[%s2 + $0x228] sm:$0xff]
    %v92 = vld [vmem:[%s2 + $0x230] sm:$0xff]
    %v93 = vld [vmem:[%s2 + $0x238] sm:$0xff]
    %v94 = vld [vmem:[%s2 + $0x240] sm:$0xff]
    %v95 = vld [vmem:[%s2 + $0x248] sm:$0xff]
    %v96 = vld [vmem:[%s2 + $0x250] sm:$0xff]
    %v97 = vld [vmem:[%s2 + $0x258] sm:$0xff]
    %v98 = vld [vmem:[%s2 + $0x260] sm:$0xff]
    %v99 = vld [vmem:[%s2 + $0x268] sm:$0xff]
    %v100 = vld [vmem:[%s2 + $0x270] sm:$0xff]
    %v101 = vld [vmem:[%s2 + $0x278] sm:$0xff]
    %v102 = vld [vmem:[%s2 + $0x280] sm:$0xff]
    %v103 = vld [vmem:[%s2 + $0x288] sm:$0xff]
    %v104 = vld [vmem:[%s2 + $0x290] sm:$0xff]
    %v105 = vld [vmem:[%s2 + $0x298] sm:$0xff]
    %v106 = vld [vmem:[%s2 + $0x2a0] sm:$0xff]
    %v107 = vld [vmem:[%s2 + $0x2a8] sm:$0xff]
    %v108 = vld [vmem:[%s2 + $0x2b0] sm:$0xff]
    %v109 = vld [vmem:[%s2 + $0x2b8] sm:$0xff]
    %v110 = vld [vmem:[%s2 + $0x2c0] sm:$0xff]
    %v111 = vld [vmem:[%s2 + $0x2c8] sm:$0xff]
    %v112 = vld [vmem:[%s2 + $0x2d0] sm:$0xff]
    %v113 = vld [vmem:[%s2 + $0x2d8] sm:$0xff]
    %v114 = vld [vmem:[%s2 + $0x2e0] sm:$0xff]
    %v115 = vld [vmem:[%s2 + $0x2e8] sm:$0xff]
    %v116 = vld [vmem:[%s2 + $0x2f0] sm:$0xff]
    %v117 = vld [vmem:[%s2 + $0x2f8] sm:$0xff]
    %v118 = vld [vmem:[%s2 + $0x300] sm:$0xff]
    %v119 = vld [vmem:[%s2 + $0x308] sm:$0xff]
    %v120 = vld [vmem:[%s2 + $0x310] sm:$0xff]
    %v121 = vld [vmem:[%s2 + $0x318] sm:$0xff]
    %v122 = vld [vmem:[%s2 + $0x320] sm:$0xff]
    %v123 = vld [vmem:[%s2 + $0x328] sm:$0xff]
    %v124 = vld [vmem:[%s2 + $0x330] sm:$0xff]
    %v125 = vld [vmem:[%s2 + $0x338] sm:$0xff]
    %v126 = vld [vmem:[%s2 + $0x340] sm:$0xff]
    %v127 = vld [vmem:[%s2 + $0x348] sm:$0xff]
    %v128 = vld [vmem:[%s2 + $0x350] sm:$0xff]
    %v129 = vld [vmem:[%s2 + $0x358] sm:$0xff]
    %v130 = vld [vmem:[%s3] sm:$0xf]
    %v131 = vld [vmem:[%s0] sm:$0xff]
    %v132 = vld [vmem:[%s0 + $0x8] sm:$0xff]
    %v133 = vld [vmem:[%s0 + $0x10] sm:$0xff]
    %v134 = vld [vmem:[%s0 + $0x18] sm:$0xff]
    %v135 = vld [vmem:[%s0 + $0x20] sm:$0xff]
    %v136 = vld [vmem:[%s0 + $0x28] sm:$0xff]
    %v137 = vld [vmem:[%s0 + $0x30] sm:$0xff]
    %v138 = vld [vmem:[%s0 + $0x38] sm:$0xff]
    %v139 = vld [vmem:[%s0 + $0x40] sm:$0xff]
    %v140 = vld [vmem:[%s0 + $0x48] sm:$0xff]
    %v141 = vld [vmem:[%s0 + $0x50] sm:$0xff]
    %v142 = vld [vmem:[%s0 + $0x58] sm:$0xff]
    %v144 = vlaneseq
    %v145 = vshrl.u32 %v144, 7
    %v146 = vsub.s32 0, %v145
    %v147 = vrot.slane %v130, %v146
    %v148 = vlaneseq
    %v149 = vshrl.u32 %v148, 7
    %v150 = vsub.s32 1, %v149
    %v151 = vrot.slane %v130, %v150
    %v152 = vlaneseq
    %v153 = vshrl.u32 %v152, 7
    %v154 = vsub.s32 2, %v153
    %v155 = vrot.slane %v130, %v154
    %v156 = vlaneseq
    %v157 = vshrl.u32 %v156, 7
    %v158 = vsub.s32 3, %v157
    %v159 = vrot.slane %v130, %v158
    %v176 = vunpack.c.l.b16 %v131
    %v177 = vunpack.c.h.b16 %v131
    %v178 = vunpack.c.l.b16 %v132
    %v179 = vunpack.c.h.b16 %v132
    %v180 = vunpack.c.l.b16 %v133
    %v181 = vunpack.c.h.b16 %v133
    %v182 = vunpack.c.l.b16 %v134
    %v183 = vunpack.c.h.b16 %v134
    %v184 = vunpack.c.l.b16 %v135
    %v185 = vunpack.c.h.b16 %v135
    %v186 = vunpack.c.l.b16 %v136
    %v187 = vunpack.c.h.b16 %v136
    %v188 = vunpack.c.l.b16 %v137
    %v189 = vunpack.c.h.b16 %v137
    %v190 = vunpack.c.l.b16 %v138
    %v191 = vunpack.c.h.b16 %v138
    %v192 = vunpack.c.l.b16 %v139
    %v193 = vunpack.c.h.b16 %v139
    %v194 = vunpack.c.l.b16 %v140
    %v195 = vunpack.c.h.b16 %v140
    %v196 = vunpack.c.l.b16 %v141
    %v197 = vunpack.c.h.b16 %v141
    %v198 = vunpack.c.l.b16 %v142
    %v199 = vunpack.c.h.b16 %v142
    %v200 = vpack.c.b16 %v180, %v176
    %v201 = vpack.c.b16 %v181, %v177
    %v202 = vpack.c.b16 %v182, %v178
    %v203 = vpack.c.b16 %v183, %v179
    %v204 = vpack.c.b16 %v188, %v184
    %v205 = vpack.c.b16 %v189, %v185
    %v206 = vpack.c.b16 %v190, %v186
    %v207 = vpack.c.b16 %v191, %v187
    %v208 = vpack.c.b16 %v196, %v192
    %v209 = vpack.c.b16 %v197, %v193
    %v210 = vpack.c.b16 %v198, %v194
    %v211 = vpack.c.b16 %v199, %v195
    %v329 = vunpack.c.l.b16 %v22
    %v330 = vunpack.c.h.b16 %v22
    %v331 = vunpack.c.l.b16 %v23
    %v332 = vunpack.c.h.b16 %v23
    %v333 = vunpack.c.l.b16 %v24
    %v334 = vunpack.c.h.b16 %v24
    %v335 = vunpack.c.l.b16 %v25
    %v336 = vunpack.c.h.b16 %v25
    %v337 = vunpack.c.l.b16 %v26
    %v338 = vunpack.c.h.b16 %v26
    %v339 = vunpack.c.l.b16 %v27
    %v340 = vunpack.c.h.b16 %v27
    %v341 = vunpack.c.l.b16 %v28
    %v342 = vunpack.c.h.b16 %v28
    %v343 = vunpack.c.l.b16 %v29
    %v344 = vunpack.c.h.b16 %v29
    %v345 = vunpack.c.l.b16 %v30
    %v346 = vunpack.c.h.b16 %v30
    %v347 = vunpack.c.l.b16 %v31
    %v348 = vunpack.c.h.b16 %v31
    %v349 = vunpack.c.l.b16 %v32
    %v350 = vunpack.c.h.b16 %v32
    %v351 = vunpack.c.l.b16 %v33
    %v352 = vunpack.c.h.b16 %v33
    %v353 = vunpack.c.l.b16 %v34
    %v354 = vunpack.c.h.b16 %v34
    %v355 = vunpack.c.l.b16 %v35
    %v356 = vunpack.c.h.b16 %v35
    %v357 = vunpack.c.l.b16 %v36
    %v358 = vunpack.c.h.b16 %v36
    %v359 = vunpack.c.l.b16 %v37
    %v360 = vunpack.c.h.b16 %v37
    %v361 = vunpack.c.l.b16 %v38
    %v362 = vunpack.c.h.b16 %v38
    %v363 = vunpack.c.l.b16 %v39
    %v364 = vunpack.c.h.b16 %v39
    %v365 = vunpack.c.l.b16 %v40
    %v366 = vunpack.c.h.b16 %v40
    %v367 = vunpack.c.l.b16 %v41
    %v368 = vunpack.c.h.b16 %v41
    %v369 = vunpack.c.l.b16 %v42
    %v370 = vunpack.c.h.b16 %v42
    %v371 = vunpack.c.l.b16 %v43
    %v372 = vunpack.c.h.b16 %v43
    %v373 = vunpack.c.l.b16 %v44
    %v374 = vunpack.c.h.b16 %v44
    %v375 = vunpack.c.l.b16 %v45
    %v376 = vunpack.c.h.b16 %v45
    %v377 = vunpack.c.l.b16 %v46
    %v378 = vunpack.c.h.b16 %v46
    %v379 = vunpack.c.l.b16 %v47
    %v380 = vunpack.c.h.b16 %v47
    %v381 = vunpack.c.l.b16 %v48
    %v382 = vunpack.c.h.b16 %v48
    %v383 = vunpack.c.l.b16 %v49
    %v384 = vunpack.c.h.b16 %v49
    %v385 = vunpack.c.l.b16 %v50
    %v386 = vunpack.c.h.b16 %v50
    %v387 = vunpack.c.l.b16 %v51
    %v388 = vunpack.c.h.b16 %v51
    %v389 = vunpack.c.l.b16 %v52
    %v390 = vunpack.c.h.b16 %v52
    %v391 = vunpack.c.l.b16 %v53
    %v392 = vunpack.c.h.b16 %v53
    %v393 = vunpack.c.l.b16 %v54
    %v394 = vunpack.c.h.b16 %v54
    %v395 = vunpack.c.l.b16 %v55
    %v396 = vunpack.c.h.b16 %v55
    %v397 = vunpack.c.l.b16 %v56
    %v398 = vunpack.c.h.b16 %v56
    %v399 = vunpack.c.l.b16 %v57
    %v400 = vunpack.c.h.b16 %v57
    %v401 = vunpack.c.l.b16 %v58
    %v402 = vunpack.c.h.b16 %v58
    %v403 = vunpack.c.l.b16 %v59
    %v404 = vunpack.c.h.b16 %v59
    %v405 = vunpack.c.l.b16 %v60
    %v406 = vunpack.c.h.b16 %v60
    %v407 = vunpack.c.l.b16 %v61
    %v408 = vunpack.c.h.b16 %v61
    %v409 = vunpack.c.l.b16 %v62
    %v410 = vunpack.c.h.b16 %v62
    %v411 = vunpack.c.l.b16 %v63
    %v412 = vunpack.c.h.b16 %v63
    %v413 = vunpack.c.l.b16 %v64
    %v414 = vunpack.c.h.b16 %v64
    %v415 = vunpack.c.l.b16 %v65
    %v416 = vunpack.c.h.b16 %v65
    %v417 = vunpack.c.l.b16 %v66
    %v418 = vunpack.c.h.b16 %v66
    %v419 = vunpack.c.l.b16 %v67
    %v420 = vunpack.c.h.b16 %v67
    %v421 = vunpack.c.l.b16 %v68
    %v422 = vunpack.c.h.b16 %v68
    %v423 = vunpack.c.l.b16 %v69
    %v424 = vunpack.c.h.b16 %v69
    %v425 = vunpack.c.l.b16 %v70
    %v426 = vunpack.c.h.b16 %v70
    %v427 = vunpack.c.l.b16 %v71
    %v428 = vunpack.c.h.b16 %v71
    %v429 = vunpack.c.l.b16 %v72
    %v430 = vunpack.c.h.b16 %v72
    %v431 = vunpack.c.l.b16 %v73
    %v432 = vunpack.c.h.b16 %v73
    %v433 = vunpack.c.l.b16 %v74
    %v434 = vunpack.c.h.b16 %v74
    %v435 = vunpack.c.l.b16 %v75
    %v436 = vunpack.c.h.b16 %v75
    %v437 = vunpack.c.l.b16 %v76
    %v438 = vunpack.c.h.b16 %v76
    %v439 = vunpack.c.l.b16 %v77
    %v440 = vunpack.c.h.b16 %v77
    %v441 = vunpack.c.l.b16 %v78
    %v442 = vunpack.c.h.b16 %v78
    %v443 = vunpack.c.l.b16 %v79
    %v444 = vunpack.c.h.b16 %v79
    %v445 = vunpack.c.l.b16 %v80
    %v446 = vunpack.c.h.b16 %v80
    %v447 = vunpack.c.l.b16 %v81
    %v448 = vunpack.c.h.b16 %v81
    %v449 = vunpack.c.l.b16 %v82
    %v450 = vunpack.c.h.b16 %v82
    %v451 = vunpack.c.l.b16 %v83
    %v452 = vunpack.c.h.b16 %v83
    %v453 = vunpack.c.l.b16 %v84
    %v454 = vunpack.c.h.b16 %v84
    %v455 = vunpack.c.l.b16 %v85
    %v456 = vunpack.c.h.b16 %v85
    %v457 = vunpack.c.l.b16 %v86
    %v458 = vunpack.c.h.b16 %v86
    %v459 = vunpack.c.l.b16 %v87
    %v460 = vunpack.c.h.b16 %v87
    %v461 = vunpack.c.l.b16 %v88
    %v462 = vunpack.c.h.b16 %v88
    %v463 = vunpack.c.l.b16 %v89
    %v464 = vunpack.c.h.b16 %v89
    %v465 = vunpack.c.l.b16 %v90
    %v466 = vunpack.c.h.b16 %v90
    %v467 = vunpack.c.l.b16 %v91
    %v468 = vunpack.c.h.b16 %v91
    %v469 = vunpack.c.l.b16 %v92
    %v470 = vunpack.c.h.b16 %v92
    %v471 = vunpack.c.l.b16 %v93
    %v472 = vunpack.c.h.b16 %v93
    %v473 = vunpack.c.l.b16 %v94
    %v474 = vunpack.c.h.b16 %v94
    %v475 = vunpack.c.l.b16 %v95
    %v476 = vunpack.c.h.b16 %v95
    %v477 = vunpack.c.l.b16 %v96
    %v478 = vunpack.c.h.b16 %v96
    %v479 = vunpack.c.l.b16 %v97
    %v480 = vunpack.c.h.b16 %v97
    %v481 = vunpack.c.l.b16 %v98
    %v482 = vunpack.c.h.b16 %v98
    %v483 = vunpack.c.l.b16 %v99
    %v484 = vunpack.c.h.b16 %v99
    %v485 = vunpack.c.l.b16 %v100
    %v486 = vunpack.c.h.b16 %v100
    %v487 = vunpack.c.l.b16 %v101
    %v488 = vunpack.c.h.b16 %v101
    %v489 = vunpack.c.l.b16 %v102
    %v490 = vunpack.c.h.b16 %v102
    %v491 = vunpack.c.l.b16 %v103
    %v492 = vunpack.c.h.b16 %v103
    %v493 = vunpack.c.l.b16 %v104
    %v494 = vunpack.c.h.b16 %v104
    %v495 = vunpack.c.l.b16 %v105
    %v496 = vunpack.c.h.b16 %v105
    %v497 = vunpack.c.l.b16 %v106
    %v498 = vunpack.c.h.b16 %v106
    %v499 = vunpack.c.l.b16 %v107
    %v500 = vunpack.c.h.b16 %v107
    %v501 = vunpack.c.l.b16 %v108
    %v502 = vunpack.c.h.b16 %v108
    %v503 = vunpack.c.l.b16 %v109
    %v504 = vunpack.c.h.b16 %v109
    %v505 = vunpack.c.l.b16 %v110
    %v506 = vunpack.c.h.b16 %v110
    %v507 = vunpack.c.l.b16 %v111
    %v508 = vunpack.c.h.b16 %v111
    %v509 = vunpack.c.l.b16 %v112
    %v510 = vunpack.c.h.b16 %v112
    %v511 = vunpack.c.l.b16 %v113
    %v512 = vunpack.c.h.b16 %v113
    %v513 = vunpack.c.l.b16 %v114
    %v514 = vunpack.c.h.b16 %v114
    %v515 = vunpack.c.l.b16 %v115
    %v516 = vunpack.c.h.b16 %v115
    %v517 = vunpack.c.l.b16 %v116
    %v518 = vunpack.c.h.b16 %v116
    %v519 = vunpack.c.l.b16 %v117
    %v520 = vunpack.c.h.b16 %v117
    %v521 = vunpack.c.l.b16 %v118
    %v522 = vunpack.c.h.b16 %v118
    %v523 = vunpack.c.l.b16 %v119
    %v524 = vunpack.c.h.b16 %v119
    %v525 = vunpack.c.l.b16 %v120
    %v526 = vunpack.c.h.b16 %v120
    %v527 = vunpack.c.l.b16 %v121
    %v528 = vunpack.c.h.b16 %v121
    %v529 = vunpack.c.l.b16 %v122
    %v530 = vunpack.c.h.b16 %v122
    %v531 = vunpack.c.l.b16 %v123
    %v532 = vunpack.c.h.b16 %v123
    %v533 = vunpack.c.l.b16 %v124
    %v534 = vunpack.c.h.b16 %v124
    %v535 = vunpack.c.l.b16 %v125
    %v536 = vunpack.c.h.b16 %v125
    %v537 = vunpack.c.l.b16 %v126
    %v538 = vunpack.c.h.b16 %v126
    %v539 = vunpack.c.l.b16 %v127
    %v540 = vunpack.c.h.b16 %v127
    %v541 = vunpack.c.l.b16 %v128
    %v542 = vunpack.c.h.b16 %v128
    %v543 = vunpack.c.l.b16 %v129
    %v544 = vunpack.c.h.b16 %v129
    %v545 = vpack.c.b16 %v333, %v329
    %v546 = vpack.c.b16 %v334, %v330
    %v547 = vpack.c.b16 %v335, %v331
    %v548 = vpack.c.b16 %v336, %v332
    %v549 = vpack.c.b16 %v341, %v337
    %v550 = vpack.c.b16 %v342, %v338
    %v551 = vpack.c.b16 %v343, %v339
    %v552 = vpack.c.b16 %v344, %v340
    %v553 = vpack.c.b16 %v349, %v345
    %v554 = vpack.c.b16 %v350, %v346
    %v555 = vpack.c.b16 %v351, %v347
    %v556 = vpack.c.b16 %v352, %v348
    %v557 = vpack.c.b16 %v357, %v353
    %v558 = vpack.c.b16 %v358, %v354
    %v559 = vpack.c.b16 %v359, %v355
    %v560 = vpack.c.b16 %v360, %v356
    %v561 = vpack.c.b16 %v365, %v361
    %v562 = vpack.c.b16 %v366, %v362
    %v563 = vpack.c.b16 %v367, %v363
    %v564 = vpack.c.b16 %v368, %v364
    %v565 = vpack.c.b16 %v373, %v369
    %v566 = vpack.c.b16 %v374, %v370
    %v567 = vpack.c.b16 %v375, %v371
    %v568 = vpack.c.b16 %v376, %v372
    %v569 = vpack.c.b16 %v381, %v377
    %v570 = vpack.c.b16 %v382, %v378
    %v571 = vpack.c.b16 %v383, %v379
    %v572 = vpack.c.b16 %v384, %v380
    %v573 = vpack.c.b16 %v389, %v385
    %v574 = vpack.c.b16 %v390, %v386
    %v575 = vpack.c.b16 %v391, %v387
    %v576 = vpack.c.b16 %v392, %v388
    %v577 = vpack.c.b16 %v397, %v393
    %v578 = vpack.c.b16 %v398, %v394
    %v579 = vpack.c.b16 %v399, %v395
    %v580 = vpack.c.b16 %v400, %v396
    %v581 = vpack.c.b16 %v405, %v401
    %v582 = vpack.c.b16 %v406, %v402
    %v583 = vpack.c.b16 %v407, %v403
    %v584 = vpack.c.b16 %v408, %v404
    %v585 = vpack.c.b16 %v413, %v409
    %v586 = vpack.c.b16 %v414, %v410
    %v587 = vpack.c.b16 %v415, %v411
    %v588 = vpack.c.b16 %v416, %v412
    %v589 = vpack.c.b16 %v421, %v417
    %v590 = vpack.c.b16 %v422, %v418
    %v591 = vpack.c.b16 %v423, %v419
    %v592 = vpack.c.b16 %v424, %v420
    %v593 = vpack.c.b16 %v429, %v425
    %v594 = vpack.c.b16 %v430, %v426
    %v595 = vpack.c.b16 %v431, %v427
    %v596 = vpack.c.b16 %v432, %v428
    %v597 = vpack.c.b16 %v437, %v433
    %v598 = vpack.c.b16 %v438, %v434
    %v599 = vpack.c.b16 %v439, %v435
    %v600 = vpack.c.b16 %v440, %v436
    %v601 = vpack.c.b16 %v445, %v441
    %v602 = vpack.c.b16 %v446, %v442
    %v603 = vpack.c.b16 %v447, %v443
    %v604 = vpack.c.b16 %v448, %v444
    %v605 = vpack.c.b16 %v453, %v449
    %v606 = vpack.c.b16 %v454, %v450
    %v607 = vpack.c.b16 %v455, %v451
    %v608 = vpack.c.b16 %v456, %v452
    %v609 = vpack.c.b16 %v461, %v457
    %v610 = vpack.c.b16 %v462, %v458
    %v611 = vpack.c.b16 %v463, %v459
    %v612 = vpack.c.b16 %v464, %v460
    %v613 = vpack.c.b16 %v469, %v465
    %v614 = vpack.c.b16 %v470, %v466
    %v615 = vpack.c.b16 %v471, %v467
    %v616 = vpack.c.b16 %v472, %v468
    %v617 = vpack.c.b16 %v477, %v473
    %v618 = vpack.c.b16 %v478, %v474
    %v619 = vpack.c.b16 %v479, %v475
    %v620 = vpack.c.b16 %v480, %v476
    %v621 = vpack.c.b16 %v485, %v481
    %v622 = vpack.c.b16 %v486, %v482
    %v623 = vpack.c.b16 %v487, %v483
    %v624 = vpack.c.b16 %v488, %v484
    %v625 = vpack.c.b16 %v493, %v489
    %v626 = vpack.c.b16 %v494, %v490
    %v627 = vpack.c.b16 %v495, %v491
    %v628 = vpack.c.b16 %v496, %v492
    %v629 = vpack.c.b16 %v501, %v497
    %v630 = vpack.c.b16 %v502, %v498
    %v631 = vpack.c.b16 %v503, %v499
    %v632 = vpack.c.b16 %v504, %v500
    %v633 = vpack.c.b16 %v509, %v505
    %v634 = vpack.c.b16 %v510, %v506
    %v635 = vpack.c.b16 %v511, %v507
    %v636 = vpack.c.b16 %v512, %v508
    %v637 = vpack.c.b16 %v517, %v513
    %v638 = vpack.c.b16 %v518, %v514
    %v639 = vpack.c.b16 %v519, %v515
    %v640 = vpack.c.b16 %v520, %v516
    %v641 = vpack.c.b16 %v525, %v521
    %v642 = vpack.c.b16 %v526, %v522
    %v643 = vpack.c.b16 %v527, %v523
    %v644 = vpack.c.b16 %v528, %v524
    %v645 = vpack.c.b16 %v533, %v529
    %v646 = vpack.c.b16 %v534, %v530
    %v647 = vpack.c.b16 %v535, %v531
    %v648 = vpack.c.b16 %v536, %v532
    %v649 = vpack.c.b16 %v541, %v537
    %v650 = vpack.c.b16 %v542, %v538
    %v651 = vpack.c.b16 %v543, %v539
    %v652 = vpack.c.b16 %v544, %v540
    %vm761 = vcmask 392192
    %v763 = vsel %vm761, %v203, 0
    %v766 = vsel %vm761, %v207, 0
    %v769 = vsel %vm761, %v211, 0
    %771 = vmatprep.subr.bf16.mxu0 %v546
    %772 = vmatpush1.bf16.msra.mxu0 %v545
    %773 = vmatprep.subr.bf16.mxu0 %v550
    %774 = vmatpush1.bf16.msra.mxu0 %v549
    %775 = vmatprep.subr.bf16.mxu0 %v554
    %776 = vmatpush1.bf16.msra.mxu0 %v553
    %777 = vmatprep.subr.bf16.mxu0 %v558
    %778 = vmatpush1.bf16.msra.mxu0 %v557
    %779 = vmatprep.subr.bf16.mxu0 %v562
    %780 = vmatpush1.bf16.msra.mxu0 %v561
    %781 = vmatprep.subr.bf16.mxu0 %v566
    %782 = vmatpush1.bf16.msra.mxu0 %v565
    %783 = vmatprep.subr.bf16.mxu0 %v570
    %784 = vmatpush1.bf16.msra.mxu0 %v569
    %785 = vmatprep.subr.bf16.mxu0 %v574
    %786 = vmatpush1.bf16.msra.mxu0 %v573
    %787 = vmatprep.subr.bf16.mxu0 %v578
    %788 = vmatpush1.bf16.msra.mxu0 %v577
    %789 = vmatprep.subr.bf16.mxu0 %v582
    %790 = vmatpush1.bf16.msra.mxu0 %v581
    %791 = vmatprep.subr.bf16.mxu0 %v586
    %792 = vmatpush1.bf16.msra.mxu0 %v585
    %793 = vmatprep.subr.bf16.mxu0 %v590
    %794 = vmatpush1.bf16.msra.mxu0 %v589
    %795 = vmatprep.subr.bf16.mxu0 %v594
    %796 = vmatpush1.bf16.msra.mxu0 %v593
    %797 = vmatprep.subr.bf16.mxu0 %v598
    %798 = vmatpush1.bf16.msra.mxu0 %v597
    %799 = vmatprep.subr.bf16.mxu0 %v602
    %800 = vmatpush1.bf16.msra.mxu0 %v601
    %801 = vmatprep.subr.bf16.mxu0 %v606
    %802 = vmatpush1.bf16.msra.mxu0 %v605
    %803 = vmatprep.mubr.bf16.mxu0 %v201
    %804 = vmatmul.mubr.bf16.gmra.mrb[0].mxu0 %v200
    %v805 = vpop.f32.mrb[0].mxu0
    %v806 = vadd.f32 %v147, %v805
    %v807 = vpop.f32.mrb[0].mxu0
    %v808 = vadd.f32 %v151, %v807
    %v809 = vpop.f32.mrb[0].mxu0
    %v810 = vadd.f32 %v147, %v809
    %v811 = vpop.f32.mrb[0].mxu0
    %v812 = vadd.f32 %v151, %v811
    %813 = vmatprep.mubr.bf16.mxu0 %v205
    %814 = vmatmul.mubr.bf16.gmra.mrb[0].mxu0 %v204
    %v815 = vpop.f32.mrb[0].mxu0
    %v816 = vadd.f32 %v147, %v815
    %v817 = vpop.f32.mrb[0].mxu0
    %v818 = vadd.f32 %v151, %v817
    %v819 = vpop.f32.mrb[0].mxu0
    %v820 = vadd.f32 %v147, %v819
    %v821 = vpop.f32.mrb[0].mxu0
    %v822 = vadd.f32 %v151, %v821
    %823 = vmatprep.mubr.bf16.mxu0 %v209
    %824 = vmatmul.mubr.bf16.gmra.mrb[0].mxu0 %v208
    %v825 = vpop.f32.mrb[0].mxu0
    %v826 = vadd.f32 %v147, %v825
    %v827 = vpop.f32.mrb[0].mxu0
    %v828 = vadd.f32 %v151, %v827
    %v829 = vpop.f32.mrb[0].mxu0
    %v830 = vadd.f32 %v147, %v829
    %v831 = vpop.f32.mrb[0].mxu0
    %v832 = vadd.f32 %v151, %v831
    %833 = vdwg.mxu0
    %834 = vmatprep.subr.bf16.mxu0 %v610
    %835 = vmatpush1.bf16.msra.mxu0 %v609
    %836 = vmatprep.subr.bf16.mxu0 %v614
    %837 = vmatpush1.bf16.msra.mxu0 %v613
    %838 = vmatprep.subr.bf16.mxu0 %v618
    %839 = vmatpush1.bf16.msra.mxu0 %v617
    %840 = vmatprep.subr.bf16.mxu0 %v622
    %841 = vmatpush1.bf16.msra.mxu0 %v621
    %842 = vmatprep.subr.bf16.mxu0 %v626
    %843 = vmatpush1.bf16.msra.mxu0 %v625
    %844 = vmatprep.subr.bf16.mxu0 %v630
    %845 = vmatpush1.bf16.msra.mxu0 %v629
    %846 = vmatprep.subr.bf16.mxu0 %v634
    %847 = vmatpush1.bf16.msra.mxu0 %v633
    %848 = vmatprep.subr.bf16.mxu0 %v638
    %849 = vmatpush1.bf16.msra.mxu0 %v637
    %850 = vmatprep.subr.bf16.mxu0 %v642
    %851 = vmatpush1.bf16.msra.mxu0 %v641
    %852 = vmatprep.subr.bf16.mxu0 %v646
    %853 = vmatpush1.bf16.msra.mxu0 %v645
    %854 = vmatprep.subr.bf16.mxu0 %v650
    %855 = vmatpush1.bf16.msra.mxu0 %v649
    %856 = vmatprep.subr.bf16.mxu0 0
    %857 = vmatpush1.bf16.msra.mxu0 0
    %858 = vmatprep.subr.bf16.mxu0 0
    %859 = vmatpush1.bf16.msra.mxu0 0
    %860 = vmatprep.subr.bf16.mxu0 0
    %861 = vmatpush1.bf16.msra.mxu0 0
    %862 = vmatprep.subr.bf16.mxu0 0
    %863 = vmatpush1.bf16.msra.mxu0 0
    %864 = vmatprep.subr.bf16.mxu0 0
    %865 = vmatpush1.bf16.msra.mxu0 0
    %866 = vmatprep.mubr.bf16.mxu0 %v763
    %867 = vmatmul.mubr.bf16.gmra.mrb[0].mxu0 %v202
    %v868 = vpop.f32.mrb[0].mxu0
    %v869 = vadd.f32 %v806, %v868
    %v870 = vpop.f32.mrb[0].mxu0
    %v871 = vadd.f32 %v808, %v870
    %v872 = vpop.f32.mrb[0].mxu0
    %v873 = vadd.f32 %v810, %v872
    %v874 = vpop.f32.mrb[0].mxu0
    %v875 = vadd.f32 %v812, %v874
    %876 = vmatprep.mubr.bf16.mxu0 %v766
    %877 = vmatmul.mubr.bf16.gmra.mrb[0].mxu0 %v206
    %v878 = vpop.f32.mrb[0].mxu0
    %v879 = vadd.f32 %v816, %v878
    %v880 = vpop.f32.mrb[0].mxu0
    %v881 = vadd.f32 %v818, %v880
    %v882 = vpop.f32.mrb[0].mxu0
    %v883 = vadd.f32 %v820, %v882
    %v884 = vpop.f32.mrb[0].mxu0
    %v885 = vadd.f32 %v822, %v884
    %886 = vmatprep.mubr.bf16.mxu0 %v769
    %887 = vmatmul.mubr.bf16.gmra.mrb[0].mxu0 %v210
    %v888 = vpop.f32.mrb[0].mxu0
    %v889 = vadd.f32 %v826, %v888
    %v890 = vpop.f32.mrb[0].mxu0
    %v891 = vadd.f32 %v828, %v890
    %v892 = vpop.f32.mrb[0].mxu0
    %v893 = vadd.f32 %v830, %v892
    %v894 = vpop.f32.mrb[0].mxu0
    %v895 = vadd.f32 %v832, %v894
    %896 = vdwg.mxu0
    %897 = vmatprep.subr.bf16.mxu0 %v548
    %898 = vmatpush1.bf16.msra.mxu0 %v547
    %899 = vmatprep.subr.bf16.mxu0 %v552
    %900 = vmatpush1.bf16.msra.mxu0 %v551
    %901 = vmatprep.subr.bf16.mxu0 %v556
    %902 = vmatpush1.bf16.msra.mxu0 %v555
    %903 = vmatprep.subr.bf16.mxu0 %v560
    %904 = vmatpush1.bf16.msra.mxu0 %v559
    %905 = vmatprep.subr.bf16.mxu0 %v564
    %906 = vmatpush1.bf16.msra.mxu0 %v563
    %907 = vmatprep.subr.bf16.mxu0 %v568
    %908 = vmatpush1.bf16.msra.mxu0 %v567
    %909 = vmatprep.subr.bf16.mxu0 %v572
    %910 = vmatpush1.bf16.msra.mxu0 %v571
    %911 = vmatprep.subr.bf16.mxu0 %v576
    %912 = vmatpush1.bf16.msra.mxu0 %v575
    %913 = vmatprep.subr.bf16.mxu0 %v580
    %914 = vmatpush1.bf16.msra.mxu0 %v579
    %915 = vmatprep.subr.bf16.mxu0 %v584
    %916 = vmatpush1.bf16.msra.mxu0 %v583
    %917 = vmatprep.subr.bf16.mxu0 %v588
    %918 = vmatpush1.bf16.msra.mxu0 %v587
    %919 = vmatprep.subr.bf16.mxu0 %v592
    %920 = vmatpush1.bf16.msra.mxu0 %v591
    %921 = vmatprep.subr.bf16.mxu0 %v596
    %922 = vmatpush1.bf16.msra.mxu0 %v595
    %923 = vmatprep.subr.bf16.mxu0 %v600
    %924 = vmatpush1.bf16.msra.mxu0 %v599
    %925 = vmatprep.subr.bf16.mxu0 %v604
    %926 = vmatpush1.bf16.msra.mxu0 %v603
    %927 = vmatprep.subr.bf16.mxu0 %v608
    %928 = vmatpush1.bf16.msra.mxu0 %v607
    %929 = vmatprep.mubr.bf16.mxu0 %v201
    %930 = vmatmul.mubr.bf16.gmra.mrb[0].mxu0 %v200
    %v931 = vpop.f32.mrb[0].mxu0
    %v932 = vadd.f32 %v155, %v931
    %v933 = vpop.f32.mrb[0].mxu0
    %v934 = vadd.f32 %v159, %v933
    %v935 = vpop.f32.mrb[0].mxu0
    %v936 = vadd.f32 %v155, %v935
    %v937 = vpop.f32.mrb[0].mxu0
    %v938 = vadd.f32 %v159, %v937
    %939 = vmatprep.mubr.bf16.mxu0 %v205
    %940 = vmatmul.mubr.bf16.gmra.mrb[0].mxu0 %v204
    %v941 = vpop.f32.mrb[0].mxu0
    %v942 = vadd.f32 %v155, %v941
    %v943 = vpop.f32.mrb[0].mxu0
    %v944 = vadd.f32 %v159, %v943
    %v945 = vpop.f32.mrb[0].mxu0
    %v946 = vadd.f32 %v155, %v945
    %v947 = vpop.f32.mrb[0].mxu0
    %v948 = vadd.f32 %v159, %v947
    %949 = vmatprep.mubr.bf16.mxu0 %v209
    %950 = vmatmul.mubr.bf16.gmra.mrb[0].mxu0 %v208
    %v951 = vpop.f32.mrb[0].mxu0
    %v952 = vadd.f32 %v155, %v951
    %v953 = vpop.f32.mrb[0].mxu0
    %v954 = vadd.f32 %v159, %v953
    %v955 = vpop.f32.mrb[0].mxu0
    %v956 = vadd.f32 %v155, %v955
    %v957 = vpop.f32.mrb[0].mxu0
    %v958 = vadd.f32 %v159, %v957
    %959 = vdwg.mxu0
    %960 = vmatprep.subr.bf16.mxu0 %v612
    %961 = vmatpush1.bf16.msra.mxu0 %v611
    %962 = vmatprep.subr.bf16.mxu0 %v616
    %963 = vmatpush1.bf16.msra.mxu0 %v615
    %964 = vmatprep.subr.bf16.mxu0 %v620
    %965 = vmatpush1.bf16.msra.mxu0 %v619
    %966 = vmatprep.subr.bf16.mxu0 %v624
    %967 = vmatpush1.bf16.msra.mxu0 %v623
    %968 = vmatprep.subr.bf16.mxu0 %v628
    %969 = vmatpush1.bf16.msra.mxu0 %v627
    %970 = vmatprep.subr.bf16.mxu0 %v632
    %971 = vmatpush1.bf16.msra.mxu0 %v631
    %972 = vmatprep.subr.bf16.mxu0 %v636
    %973 = vmatpush1.bf16.msra.mxu0 %v635
    %974 = vmatprep.subr.bf16.mxu0 %v640
    %975 = vmatpush1.bf16.msra.mxu0 %v639
    %976 = vmatprep.subr.bf16.mxu0 %v644
    %977 = vmatpush1.bf16.msra.mxu0 %v643
    %978 = vmatprep.subr.bf16.mxu0 %v648
    %979 = vmatpush1.bf16.msra.mxu0 %v647
    %980 = vmatprep.subr.bf16.mxu0 %v652
    %981 = vmatpush1.bf16.msra.mxu0 %v651
    %982 = vmatprep.subr.bf16.mxu0 0
    %983 = vmatpush1.bf16.msra.mxu0 0
    %984 = vmatprep.subr.bf16.mxu0 0
    %985 = vmatpush1.bf16.msra.mxu0 0
    %986 = vmatprep.subr.bf16.mxu0 0
    %987 = vmatpush1.bf16.msra.mxu0 0
    %988 = vmatprep.subr.bf16.mxu0 0
    %989 = vmatpush1.bf16.msra.mxu0 0
    %990 = vmatprep.subr.bf16.mxu0 0
    %991 = vmatpush1.bf16.msra.mxu0 0
    %992 = vmatprep.mubr.bf16.mxu0 %v763
    %993 = vmatmul.mubr.bf16.gmra.mrb[0].mxu0 %v202
    %v994 = vpop.f32.mrb[0].mxu0
    %v995 = vadd.f32 %v932, %v994
    %v996 = vpop.f32.mrb[0].mxu0
    %v997 = vadd.f32 %v934, %v996
    %v998 = vpop.f32.mrb[0].mxu0
    %v999 = vadd.f32 %v936, %v998
    %v1000 = vpop.f32.mrb[0].mxu0
    %v1001 = vadd.f32 %v938, %v1000
    %1002 = vmatprep.mubr.bf16.mxu0 %v766
    %1003 = vmatmul.mubr.bf16.gmra.mrb[0].mxu0 %v206
    %v1004 = vpop.f32.mrb[0].mxu0
    %v1005 = vadd.f32 %v942, %v1004
    %v1006 = vpop.f32.mrb[0].mxu0
    %v1007 = vadd.f32 %v944, %v1006
    %v1008 = vpop.f32.mrb[0].mxu0
    %v1009 = vadd.f32 %v946, %v1008
    %v1010 = vpop.f32.mrb[0].mxu0
    %v1011 = vadd.f32 %v948, %v1010
    %1012 = vmatprep.mubr.bf16.mxu0 %v769
    %1013 = vmatmul.mubr.bf16.gmra.mrb[0].mxu0 %v210
    %v1014 = vpop.f32.mrb[0].mxu0
    %v1015 = vadd.f32 %v952, %v1014
    %v1016 = vpop.f32.mrb[0].mxu0
    %v1017 = vadd.f32 %v954, %v1016
    %v1018 = vpop.f32.mrb[0].mxu0
    %v1019 = vadd.f32 %v956, %v1018
    %v1020 = vpop.f32.mrb[0].mxu0
    %v1021 = vadd.f32 %v958, %v1020
    %1022 = vdwg.mxu0
    %v1023 = vpack.c.bf16 %v873, %v869
    %v1024 = vpack.c.bf16 %v875, %v871
    %v1025 = vpack.c.bf16 %v999, %v995
    %v1026 = vpack.c.bf16 %v1001, %v997
    %v1027 = vpack.c.bf16 %v883, %v879
    %v1028 = vpack.c.bf16 %v885, %v881
    %v1029 = vpack.c.bf16 %v1009, %v1005
    %v1030 = vpack.c.bf16 %v1011, %v1007
    %v1031 = vpack.c.bf16 %v893, %v889
    %v1032 = vpack.c.bf16 %v895, %v891
    %v1033 = vpack.c.bf16 %v1019, %v1015
    %v1034 = vpack.c.bf16 %v1021, %v1017
    %v1047 = vunpack.c.l.b16 %v1023
    %v1048 = vunpack.c.l.b16 %v1024
    %v1049 = vunpack.c.l.b16 %v1025
    %v1050 = vunpack.c.l.b16 %v1026
    %v1051 = vunpack.c.h.b16 %v1023
    %v1052 = vunpack.c.h.b16 %v1024
    %v1053 = vunpack.c.h.b16 %v1025
    %v1054 = vunpack.c.h.b16 %v1026
    %v1055 = vunpack.c.l.b16 %v1027
    %v1056 = vunpack.c.l.b16 %v1028
    %v1057 = vunpack.c.l.b16 %v1029
    %v1058 = vunpack.c.l.b16 %v1030
    %v1059 = vunpack.c.h.b16 %v1027
    %v1060 = vunpack.c.h.b16 %v1028
    %v1061 = vunpack.c.h.b16 %v1029
    %v1062 = vunpack.c.h.b16 %v1030
    %v1063 = vunpack.c.l.b16 %v1031
    %v1064 = vunpack.c.l.b16 %v1032
    %v1065 = vunpack.c.l.b16 %v1033
    %v1066 = vunpack.c.l.b16 %v1034
    %v1067 = vunpack.c.h.b16 %v1031
    %v1068 = vunpack.c.h.b16 %v1032
    %v1069 = vunpack.c.h.b16 %v1033
    %v1070 = vunpack.c.h.b16 %v1034
    %v1071 = vpack.c.b16 %v1048, %v1047
    %v1072 = vpack.c.b16 %v1050, %v1049
    %v1073 = vpack.c.b16 %v1052, %v1051
    %v1074 = vpack.c.b16 %v1054, %v1053
    %v1075 = vpack.c.b16 %v1056, %v1055
    %v1076 = vpack.c.b16 %v1058, %v1057
    %v1077 = vpack.c.b16 %v1060, %v1059
    %v1078 = vpack.c.b16 %v1062, %v1061
    %v1079 = vpack.c.b16 %v1064, %v1063
    %v1080 = vpack.c.b16 %v1066, %v1065
    %v1081 = vpack.c.b16 %v1068, %v1067
    %v1082 = vpack.c.b16 %v1070, %v1069
    %1095 = vst [vmem:[#allocation2] sm:$0xff] %v1071
    %vm1096 = vcmask 1043456
    %vm1097 = vcmask 130052
    %vm1098 = vmor %vm1097, %vm1096
    %1099 = vst.msk [vmem:[#allocation2 + $0x8] sm:$0xff] %vm1098, %v1072
    %1100 = vst [vmem:[#allocation2 + $0x10] sm:$0xff] %v1073
    %1101 = vst.msk [vmem:[#allocation2 + $0x18] sm:$0xff] %vm1098, %v1074
    %1102 = vst [vmem:[#allocation2 + $0x20] sm:$0xff] %v1075
    %1103 = vst.msk [vmem:[#allocation2 + $0x28] sm:$0xff] %vm1098, %v1076
    %1104 = vst [vmem:[#allocation2 + $0x30] sm:$0xff] %v1077
    %1105 = vst.msk [vmem:[#allocation2 + $0x38] sm:$0xff] %vm1098, %v1078
    %1106 = vst [vmem:[#allocation2 + $0x40] sm:$0xff] %v1079
    %1107 = vst.msk [vmem:[#allocation2 + $0x48] sm:$0xff] %vm1098, %v1080
    %1108 = vst [vmem:[#allocation2 + $0x50] sm:$0xff] %v1081
    %1109 = vst.msk [vmem:[#allocation2 + $0x58] sm:$0xff] %vm1098, %v1082
    %v1110 = vld [vmem:[%s1] sm:$0xff]
    %v1111 = vld [vmem:[%s1 + $0x8] sm:$0xff]
    %v1112 = vld [vmem:[%s1 + $0x10] sm:$0xff]
    %v1113 = vld [vmem:[%s1 + $0x18] sm:$0xff]
    %v1114 = vld [vmem:[%s1 + $0x20] sm:$0xff]
    %v1115 = vld [vmem:[%s1 + $0x28] sm:$0xff]
    %v1116 = vld [vmem:[%s1 + $0x30] sm:$0xff]
    %v1117 = vld [vmem:[%s1 + $0x38] sm:$0xff]
    %v1118 = vld [vmem:[%s1 + $0x40] sm:$0xff]
    %v1119 = vld [vmem:[%s1 + $0x48] sm:$0xff]
    %v1120 = vld [vmem:[%s1 + $0x50] sm:$0xff]
    %v1121 = vld [vmem:[%s1 + $0x58] sm:$0xff]
    %v1134 = vunpack.c.l.b16 %v1110
    %v1135 = vunpack.c.h.b16 %v1110
    %v1136 = vunpack.c.l.b16 %v1111
    %v1137 = vunpack.c.h.b16 %v1111
    %v1138 = vunpack.c.l.b16 %v1112
    %v1139 = vunpack.c.h.b16 %v1112
    %v1140 = vunpack.c.l.b16 %v1113
    %v1141 = vunpack.c.h.b16 %v1113
    %v1142 = vunpack.c.l.b16 %v1114
    %v1143 = vunpack.c.h.b16 %v1114
    %v1144 = vunpack.c.l.b16 %v1115
    %v1145 = vunpack.c.h.b16 %v1115
    %v1146 = vunpack.c.l.b16 %v1116
    %v1147 = vunpack.c.h.b16 %v1116
    %v1148 = vunpack.c.l.b16 %v1117
    %v1149 = vunpack.c.h.b16 %v1117
    %v1150 = vunpack.c.l.b16 %v1118
    %v1151 = vunpack.c.h.b16 %v1118
    %v1152 = vunpack.c.l.b16 %v1119
    %v1153 = vunpack.c.h.b16 %v1119
    %v1154 = vunpack.c.l.b16 %v1120
    %v1155 = vunpack.c.h.b16 %v1120
    %v1156 = vunpack.c.l.b16 %v1121
    %v1157 = vunpack.c.h.b16 %v1121
    %v1158 = vpack.c.b16 %v1138, %v1134
    %v1159 = vpack.c.b16 %v1139, %v1135
    %v1160 = vpack.c.b16 %v1140, %v1136
    %v1161 = vpack.c.b16 %v1141, %v1137
    %v1162 = vpack.c.b16 %v1146, %v1142
    %v1163 = vpack.c.b16 %v1147, %v1143
    %v1164 = vpack.c.b16 %v1148, %v1144
    %v1165 = vpack.c.b16 %v1149, %v1145
    %v1166 = vpack.c.b16 %v1154, %v1150
    %v1167 = vpack.c.b16 %v1155, %v1151
    %v1168 = vpack.c.b16 %v1156, %v1152
    %v1169 = vpack.c.b16 %v1157, %v1153
    %v1180 = vsel %vm761, %v1161, 0
    %v1183 = vsel %vm761, %v1165, 0
    %v1186 = vsel %vm761, %v1169, 0
    %1188 = vmatprep.subr.bf16.mxu0 %v546
    %1189 = vmatpush1.bf16.msra.mxu0 %v545
    %1190 = vmatprep.subr.bf16.mxu0 %v550
    %1191 = vmatpush1.bf16.msra.mxu0 %v549
    %1192 = vmatprep.subr.bf16.mxu0 %v554
    %1193 = vmatpush1.bf16.msra.mxu0 %v553
    %1194 = vmatprep.subr.bf16.mxu0 %v558
    %1195 = vmatpush1.bf16.msra.mxu0 %v557
    %1196 = vmatprep.subr.bf16.mxu0 %v562
    %1197 = vmatpush1.bf16.msra.mxu0 %v561
    %1198 = vmatprep.subr.bf16.mxu0 %v566
    %1199 = vmatpush1.bf16.msra.mxu0 %v565
    %1200 = vmatprep.subr.bf16.mxu0 %v570
    %1201 = vmatpush1.bf16.msra.mxu0 %v569
    %1202 = vmatprep.subr.bf16.mxu0 %v574
    %1203 = vmatpush1.bf16.msra.mxu0 %v573
    %1204 = vmatprep.subr.bf16.mxu0 %v578
    %1205 = vmatpush1.bf16.msra.mxu0 %v577
    %1206 = vmatprep.subr.bf16.mxu0 %v582
    %1207 = vmatpush1.bf16.msra.mxu0 %v581
    %1208 = vmatprep.subr.bf16.mxu0 %v586
    %1209 = vmatpush1.bf16.msra.mxu0 %v585
    %1210 = vmatprep.subr.bf16.mxu0 %v590
    %1211 = vmatpush1.bf16.msra.mxu0 %v589
    %1212 = vmatprep.subr.bf16.mxu0 %v594
    %1213 = vmatpush1.bf16.msra.mxu0 %v593
    %1214 = vmatprep.subr.bf16.mxu0 %v598
    %1215 = vmatpush1.bf16.msra.mxu0 %v597
    %1216 = vmatprep.subr.bf16.mxu0 %v602
    %1217 = vmatpush1.bf16.msra.mxu0 %v601
    %1218 = vmatprep.subr.bf16.mxu0 %v606
    %1219 = vmatpush1.bf16.msra.mxu0 %v605
    %1220 = vmatprep.mubr.bf16.mxu0 %v1159
    %1221 = vmatmul.mubr.bf16.gmra.mrb[0].mxu0 %v1158
    %v1222 = vpop.f32.mrb[0].mxu0
    %v1223 = vadd.f32 %v147, %v1222
    %v1224 = vpop.f32.mrb[0].mxu0
    %v1225 = vadd.f32 %v151, %v1224
    %v1226 = vpop.f32.mrb[0].mxu0
    %v1227 = vadd.f32 %v147, %v1226
    %v1228 = vpop.f32.mrb[0].mxu0
    %v1229 = vadd.f32 %v151, %v1228
    %1230 = vmatprep.mubr.bf16.mxu0 %v1163
    %1231 = vmatmul.mubr.bf16.gmra.mrb[0].mxu0 %v1162
    %v1232 = vpop.f32.mrb[0].mxu0
    %v1233 = vadd.f32 %v147, %v1232
    %v1234 = vpop.f32.mrb[0].mxu0
    %v1235 = vadd.f32 %v151, %v1234
    %v1236 = vpop.f32.mrb[0].mxu0
    %v1237 = vadd.f32 %v147, %v1236
    %v1238 = vpop.f32.mrb[0].mxu0
    %v1239 = vadd.f32 %v151, %v1238
    %1240 = vmatprep.mubr.bf16.mxu0 %v1167
    %1241 = vmatmul.mubr.bf16.gmra.mrb[0].mxu0 %v1166
    %v1242 = vpop.f32.mrb[0].mxu0
    %v1243 = vadd.f32 %v147, %v1242
    %v1244 = vpop.f32.mrb[0].mxu0
    %v1245 = vadd.f32 %v151, %v1244
    %v1246 = vpop.f32.mrb[0].mxu0
    %v1247 = vadd.f32 %v147, %v1246
    %v1248 = vpop.f32.mrb[0].mxu0
    %v1249 = vadd.f32 %v151, %v1248
    %1250 = vdwg.mxu0
    %1251 = vmatprep.subr.bf16.mxu0 %v610
    %1252 = vmatpush1.bf16.msra.mxu0 %v609
    %1253 = vmatprep.subr.bf16.mxu0 %v614
    %1254 = vmatpush1.bf16.msra.mxu0 %v613
    %1255 = vmatprep.subr.bf16.mxu0 %v618
    %1256 = vmatpush1.bf16.msra.mxu0 %v617
    %1257 = vmatprep.subr.bf16.mxu0 %v622
    %1258 = vmatpush1.bf16.msra.mxu0 %v621
    %1259 = vmatprep.subr.bf16.mxu0 %v626
    %1260 = vmatpush1.bf16.msra.mxu0 %v625
    %1261 = vmatprep.subr.bf16.mxu0 %v630
    %1262 = vmatpush1.bf16.msra.mxu0 %v629
    %1263 = vmatprep.subr.bf16.mxu0 %v634
    %1264 = vmatpush1.bf16.msra.mxu0 %v633
    %1265 = vmatprep.subr.bf16.mxu0 %v638
    %1266 = vmatpush1.bf16.msra.mxu0 %v637
    %1267 = vmatprep.subr.bf16.mxu0 %v642
    %1268 = vmatpush1.bf16.msra.mxu0 %v641
    %1269 = vmatprep.subr.bf16.mxu0 %v646
    %1270 = vmatpush1.bf16.msra.mxu0 %v645
    %1271 = vmatprep.subr.bf16.mxu0 %v650
    %1272 = vmatpush1.bf16.msra.mxu0 %v649
    %1273 = vmatprep.subr.bf16.mxu0 0
    %1274 = vmatpush1.bf16.msra.mxu0 0
    %1275 = vmatprep.subr.bf16.mxu0 0
    %1276 = vmatpush1.bf16.msra.mxu0 0
    %1277 = vmatprep.subr.bf16.mxu0 0
    %1278 = vmatpush1.bf16.msra.mxu0 0
    %1279 = vmatprep.subr.bf16.mxu0 0
    %1280 = vmatpush1.bf16.msra.mxu0 0
    %1281 = vmatprep.subr.bf16.mxu0 0
    %1282 = vmatpush1.bf16.msra.mxu0 0
    %1283 = vmatprep.mubr.bf16.mxu0 %v1180
    %1284 = vmatmul.mubr.bf16.gmra.mrb[0].mxu0 %v1160
    %v1285 = vpop.f32.mrb[0].mxu0
    %v1286 = vadd.f32 %v1223, %v1285
    %v1287 = vpop.f32.mrb[0].mxu0
    %v1288 = vadd.f32 %v1225, %v1287
    %v1289 = vpop.f32.mrb[0].mxu0
    %v1290 = vadd.f32 %v1227, %v1289
    %v1291 = vpop.f32.mrb[0].mxu0
    %v1292 = vadd.f32 %v1229, %v1291
    %1293 = vmatprep.mubr.bf16.mxu0 %v1183
    %1294 = vmatmul.mubr.bf16.gmra.mrb[0].mxu0 %v1164
    %v1295 = vpop.f32.mrb[0].mxu0
    %v1296 = vadd.f32 %v1233, %v1295
    %v1297 = vpop.f32.mrb[0].mxu0
    %v1298 = vadd.f32 %v1235, %v1297
    %v1299 = vpop.f32.mrb[0].mxu0
    %v1300 = vadd.f32 %v1237, %v1299
    %v1301 = vpop.f32.mrb[0].mxu0
    %v1302 = vadd.f32 %v1239, %v1301
    %1303 = vmatprep.mubr.bf16.mxu0 %v1186
    %1304 = vmatmul.mubr.bf16.gmra.mrb[0].mxu0 %v1168
    %v1305 = vpop.f32.mrb[0].mxu0
    %v1306 = vadd.f32 %v1243, %v1305
    %v1307 = vpop.f32.mrb[0].mxu0
    %v1308 = vadd.f32 %v1245, %v1307
    %v1309 = vpop.f32.mrb[0].mxu0
    %v1310 = vadd.f32 %v1247, %v1309
    %v1311 = vpop.f32.mrb[0].mxu0
    %v1312 = vadd.f32 %v1249, %v1311
    %1313 = vdwg.mxu0
    %1314 = vmatprep.subr.bf16.mxu0 %v548
    %1315 = vmatpush1.bf16.msra.mxu0 %v547
    %1316 = vmatprep.subr.bf16.mxu0 %v552
    %1317 = vmatpush1.bf16.msra.mxu0 %v551
    %1318 = vmatprep.subr.bf16.mxu0 %v556
    %1319 = vmatpush1.bf16.msra.mxu0 %v555
    %1320 = vmatprep.subr.bf16.mxu0 %v560
    %1321 = vmatpush1.bf16.msra.mxu0 %v559
    %1322 = vmatprep.subr.bf16.mxu0 %v564
    %1323 = vmatpush1.bf16.msra.mxu0 %v563
    %1324 = vmatprep.subr.bf16.mxu0 %v568
    %1325 = vmatpush1.bf16.msra.mxu0 %v567
    %1326 = vmatprep.subr.bf16.mxu0 %v572
    %1327 = vmatpush1.bf16.msra.mxu0 %v571
    %1328 = vmatprep.subr.bf16.mxu0 %v576
    %1329 = vmatpush1.bf16.msra.mxu0 %v575
    %1330 = vmatprep.subr.bf16.mxu0 %v580
    %1331 = vmatpush1.bf16.msra.mxu0 %v579
    %1332 = vmatprep.subr.bf16.mxu0 %v584
    %1333 = vmatpush1.bf16.msra.mxu0 %v583
    %1334 = vmatprep.subr.bf16.mxu0 %v588
    %1335 = vmatpush1.bf16.msra.mxu0 %v587
    %1336 = vmatprep.subr.bf16.mxu0 %v592
    %1337 = vmatpush1.bf16.msra.mxu0 %v591
    %1338 = vmatprep.subr.bf16.mxu0 %v596
    %1339 = vmatpush1.bf16.msra.mxu0 %v595
    %1340 = vmatprep.subr.bf16.mxu0 %v600
    %1341 = vmatpush1.bf16.msra.mxu0 %v599
    %1342 = vmatprep.subr.bf16.mxu0 %v604
    %1343 = vmatpush1.bf16.msra.mxu0 %v603
    %1344 = vmatprep.subr.bf16.mxu0 %v608
    %1345 = vmatpush1.bf16.msra.mxu0 %v607
    %1346 = vmatprep.mubr.bf16.mxu0 %v1159
    %1347 = vmatmul.mubr.bf16.gmra.mrb[0].mxu0 %v1158
    %v1348 = vpop.f32.mrb[0].mxu0
    %v1349 = vadd.f32 %v155, %v1348
    %v1350 = vpop.f32.mrb[0].mxu0
    %v1351 = vadd.f32 %v159, %v1350
    %v1352 = vpop.f32.mrb[0].mxu0
    %v1353 = vadd.f32 %v155, %v1352
    %v1354 = vpop.f32.mrb[0].mxu0
    %v1355 = vadd.f32 %v159, %v1354
    %1356 = vmatprep.mubr.bf16.mxu0 %v1163
    %1357 = vmatmul.mubr.bf16.gmra.mrb[0].mxu0 %v1162
    %v1358 = vpop.f32.mrb[0].mxu0
    %v1359 = vadd.f32 %v155, %v1358
    %v1360 = vpop.f32.mrb[0].mxu0
    %v1361 = vadd.f32 %v159, %v1360
    %v1362 = vpop.f32.mrb[0].mxu0
    %v1363 = vadd.f32 %v155, %v1362
    %v1364 = vpop.f32.mrb[0].mxu0
    %v1365 = vadd.f32 %v159, %v1364
    %1366 = vmatprep.mubr.bf16.mxu0 %v1167
    %1367 = vmatmul.mubr.bf16.gmra.mrb[0].mxu0 %v1166
    %v1368 = vpop.f32.mrb[0].mxu0
    %v1369 = vadd.f32 %v155, %v1368
    %v1370 = vpop.f32.mrb[0].mxu0
    %v1371 = vadd.f32 %v159, %v1370
    %v1372 = vpop.f32.mrb[0].mxu0
    %v1373 = vadd.f32 %v155, %v1372
    %v1374 = vpop.f32.mrb[0].mxu0
    %v1375 = vadd.f32 %v159, %v1374
    %1376 = vdwg.mxu0
    %1377 = vmatprep.subr.bf16.mxu0 %v612
    %1378 = vmatpush1.bf16.msra.mxu0 %v611
    %1379 = vmatprep.subr.bf16.mxu0 %v616
    %1380 = vmatpush1.bf16.msra.mxu0 %v615
    %1381 = vmatprep.subr.bf16.mxu0 %v620
    %1382 = vmatpush1.bf16.msra.mxu0 %v619
    %1383 = vmatprep.subr.bf16.mxu0 %v624
    %1384 = vmatpush1.bf16.msra.mxu0 %v623
    %1385 = vmatprep.subr.bf16.mxu0 %v628
    %1386 = vmatpush1.bf16.msra.mxu0 %v627
    %1387 = vmatprep.subr.bf16.mxu0 %v632
    %1388 = vmatpush1.bf16.msra.mxu0 %v631
    %1389 = vmatprep.subr.bf16.mxu0 %v636
    %1390 = vmatpush1.bf16.msra.mxu0 %v635
    %1391 = vmatprep.subr.bf16.mxu0 %v640
    %1392 = vmatpush1.bf16.msra.mxu0 %v639
    %1393 = vmatprep.subr.bf16.mxu0 %v644
    %1394 = vmatpush1.bf16.msra.mxu0 %v643
    %1395 = vmatprep.subr.bf16.mxu0 %v648
    %1396 = vmatpush1.bf16.msra.mxu0 %v647
    %1397 = vmatprep.subr.bf16.mxu0 %v652
    %1398 = vmatpush1.bf16.msra.mxu0 %v651
    %1399 = vmatprep.subr.bf16.mxu0 0
    %1400 = vmatpush1.bf16.msra.mxu0 0
    %1401 = vmatprep.subr.bf16.mxu0 0
    %1402 = vmatpush1.bf16.msra.mxu0 0
    %1403 = vmatprep.subr.bf16.mxu0 0
    %1404 = vmatpush1.bf16.msra.mxu0 0
    %1405 = vmatprep.subr.bf16.mxu0 0
    %1406 = vmatpush1.bf16.msra.mxu0 0
    %1407 = vmatprep.subr.bf16.mxu0 0
    %1408 = vmatpush1.bf16.msra.mxu0 0
    %1409 = vmatprep.mubr.bf16.mxu0 %v1180
    %1410 = vmatmul.mubr.bf16.gmra.mrb[0].mxu0 %v1160
    %v1411 = vpop.f32.mrb[0].mxu0
    %v1412 = vadd.f32 %v1349, %v1411
    %v1413 = vpop.f32.mrb[0].mxu0
    %v1414 = vadd.f32 %v1351, %v1413
    %v1415 = vpop.f32.mrb[0].mxu0
    %v1416 = vadd.f32 %v1353, %v1415
    %v1417 = vpop.f32.mrb[0].mxu0
    %v1418 = vadd.f32 %v1355, %v1417
    %1419 = vmatprep.mubr.bf16.mxu0 %v1183
    %1420 = vmatmul.mubr.bf16.gmra.mrb[0].mxu0 %v1164
    %v1421 = vpop.f32.mrb[0].mxu0
    %v1422 = vadd.f32 %v1359, %v1421
    %v1423 = vpop.f32.mrb[0].mxu0
    %v1424 = vadd.f32 %v1361, %v1423
    %v1425 = vpop.f32.mrb[0].mxu0
    %v1426 = vadd.f32 %v1363, %v1425
    %v1427 = vpop.f32.mrb[0].mxu0
    %v1428 = vadd.f32 %v1365, %v1427
    %1429 = vmatprep.mubr.bf16.mxu0 %v1186
    %1430 = vmatmul.mubr.bf16.gmra.mrb[0].mxu0 %v1168
    %v1431 = vpop.f32.mrb[0].mxu0
    %v1432 = vadd.f32 %v1369, %v1431
    %v1433 = vpop.f32.mrb[0].mxu0
    %v1434 = vadd.f32 %v1371, %v1433
    %v1435 = vpop.f32.mrb[0].mxu0
    %v1436 = vadd.f32 %v1373, %v1435
    %v1437 = vpop.f32.mrb[0].mxu0
    %v1438 = vadd.f32 %v1375, %v1437
    %1439 = vdwg.mxu0
    %v1440 = vpack.c.bf16 %v1290, %v1286
    %v1441 = vpack.c.bf16 %v1292, %v1288
    %v1442 = vpack.c.bf16 %v1416, %v1412
    %v1443 = vpack.c.bf16 %v1418, %v1414
    %v1444 = vpack.c.bf16 %v1300, %v1296
    %v1445 = vpack.c.bf16 %v1302, %v1298
    %v1446 = vpack.c.bf16 %v1426, %v1422
    %v1447 = vpack.c.bf16 %v1428, %v1424
    %v1448 = vpack.c.bf16 %v1310, %v1306
    %v1449 = vpack.c.bf16 %v1312, %v1308
    %v1450 = vpack.c.bf16 %v1436, %v1432
    %v1451 = vpack.c.bf16 %v1438, %v1434
    %v1464 = vunpack.c.l.b16 %v1440
    %v1465 = vunpack.c.l.b16 %v1441
    %v1466 = vunpack.c.l.b16 %v1442
    %v1467 = vunpack.c.l.b16 %v1443
    %v1468 = vunpack.c.h.b16 %v1440
    %v1469 = vunpack.c.h.b16 %v1441
    %v1470 = vunpack.c.h.b16 %v1442
    %v1471 = vunpack.c.h.b16 %v1443
    %v1472 = vunpack.c.l.b16 %v1444
    %v1473 = vunpack.c.l.b16 %v1445
    %v1474 = vunpack.c.l.b16 %v1446
    %v1475 = vunpack.c.l.b16 %v1447
    %v1476 = vunpack.c.h.b16 %v1444
    %v1477 = vunpack.c.h.b16 %v1445
    %v1478 = vunpack.c.h.b16 %v1446
    %v1479 = vunpack.c.h.b16 %v1447
    %v1480 = vunpack.c.l.b16 %v1448
    %v1481 = vunpack.c.l.b16 %v1449
    %v1482 = vunpack.c.l.b16 %v1450
    %v1483 = vunpack.c.l.b16 %v1451
    %v1484 = vunpack.c.h.b16 %v1448
    %v1485 = vunpack.c.h.b16 %v1449
    %v1486 = vunpack.c.h.b16 %v1450
    %v1487 = vunpack.c.h.b16 %v1451
    %v1488 = vpack.c.b16 %v1465, %v1464
    %v1489 = vpack.c.b16 %v1467, %v1466
    %v1490 = vpack.c.b16 %v1469, %v1468
    %v1491 = vpack.c.b16 %v1471, %v1470
    %v1492 = vpack.c.b16 %v1473, %v1472
    %v1493 = vpack.c.b16 %v1475, %v1474
    %v1494 = vpack.c.b16 %v1477, %v1476
    %v1495 = vpack.c.b16 %v1479, %v1478
    %v1496 = vpack.c.b16 %v1481, %v1480
    %v1497 = vpack.c.b16 %v1483, %v1482
    %v1498 = vpack.c.b16 %v1485, %v1484
    %v1499 = vpack.c.b16 %v1487, %v1486
    %1512 = vst [vmem:[#allocation4] sm:$0xff] %v1488
    %1513 = vst.msk [vmem:[#allocation4 + $0x8] sm:$0xff] %vm1098, %v1489
    %1514 = vst [vmem:[#allocation4 + $0x10] sm:$0xff] %v1490
    %1515 = vst.msk [vmem:[#allocation4 + $0x18] sm:$0xff] %vm1098, %v1491
    %1516 = vst [vmem:[#allocation4 + $0x20] sm:$0xff] %v1492
    %1517 = vst.msk [vmem:[#allocation4 + $0x28] sm:$0xff] %vm1098, %v1493
    %1518 = vst [vmem:[#allocation4 + $0x30] sm:$0xff] %v1494
    %1519 = vst.msk [vmem:[#allocation4 + $0x38] sm:$0xff] %vm1098, %v1495
    %1520 = vst [vmem:[#allocation4 + $0x40] sm:$0xff] %v1496
    %1521 = vst.msk [vmem:[#allocation4 + $0x48] sm:$0xff] %vm1098, %v1497
    %1522 = vst [vmem:[#allocation4 + $0x50] sm:$0xff] %v1498
    %1523 = vst.msk [vmem:[#allocation4 + $0x58] sm:$0xff] %vm1098, %v1499
    // Predicated region
    $region18: #{tpu_custom_call.1} parent=1 // pred_check
      _
    $region19: #{tpu_custom_call.1} parent=1 // pred_check_branch
      %1525 = sbr.rel (0) target = $region21
    $region20: #{tpu_custom_call.1} parent=1 // pred_region
      %s1527 = ssub.s32 1536, 1536
      %1528 = vsyncadd [#allocation3], %s1527
      %s1529 = sshll.u32 [#allocation2], 4
      %s1530 = int_to_ptr.vmem [resolvable:$true] %s1529
      %1535 = dma.vmem_to_hbm [thread:$0]  %s1530, 1536, %s4, [#allocation3], 256, 256, 16
    $region21: #{tpu_custom_call.1} parent=1 // pred_fallthru
      _
    // Predicated region
    $region22: #{tpu_custom_call.1} parent=1 // pred_check
      _
    $region23: #{tpu_custom_call.1} parent=1 // pred_check_branch
      %1537 = sbr.rel (0) target = $region25
    $region24: #{tpu_custom_call.1} parent=1 // pred_region
      %s1539 = ssub.s32 1536, 1536
      %1540 = vsyncadd [#allocation5], %s1539
      %s1541 = sshll.u32 [#allocation4], 4
      %s1542 = int_to_ptr.vmem [resolvable:$true] %s1541
      %1547 = dma.vmem_to_hbm [thread:$0]  %s1542, 1536, %s5, [#allocation5], 256, 256, 16
    $region25: #{tpu_custom_call.1} parent=1 // pred_fallthru
      _
    // Predicated region
    $region26: #{tpu_custom_call.1} parent=1 // pred_check
      _
    $region27: #{tpu_custom_call.1} parent=1 // pred_check_branch
      %1549 = sbr.rel (0) target = $region29
    $region28: #{tpu_custom_call.1} parent=1 // pred_region
      %1550 = dma.done [#allocation3], 1536
    $region29: #{tpu_custom_call.1} parent=1 // pred_fallthru
      _
    // Predicated region
    $region30: #{tpu_custom_call.1} parent=1 // pred_check
      _
    $region31: #{tpu_custom_call.1} parent=1 // pred_check_branch
      %1552 = sbr.rel (0) target = $region33
    $region32: #{tpu_custom_call.1} parent=1 // pred_region
      %1553 = dma.done [#allocation5], 1536
    $region33: #{tpu_custom_call.1} parent=1 // pred_fallthru
      _
    %1554 = vsyncpa [#allocation3], 1
    %1555 = vsyncpa [#allocation5], 1

</llo_original>
